<compile_context>
chip_gen: v7x
topology: tpu7x:2x2x1
jax: 0.10.0
libtpu: 0.0.40
codegen_flags: <defaults>
</compile_context>

<pallas_src>
import functools

import jax
import jax.numpy as jnp
from jax.experimental import pallas as pl
from jax.experimental.pallas import tpu as pltpu

_LANE = 128     # lane width of a vreg (minor dim)
_SUBLANE = 8    # f32 sublanes per vreg (second-minor dim)


def _round_up(x, m):
    return ((x + m - 1) // m) * m


def _nconv_kernel(x_ref, at_ref, o_ref, xt_ref, y_ref):
    # x_ref : (tb, W, L)   input tile (slabs over the flattened N*C axis)
    # at_ref: (W, V)       A^T, resident across all grid steps
    # o_ref : (tb, V, L)   output tile (NCVL layout)
    # xt_ref: (tb*L, W)    scratch: lane-dense LHS for the merged matmul
    # y_ref : (tb*L, V)    scratch: lane-dense matmul result (f32 accumulate)
    tb, W, L = x_ref.shape
    V = at_ref.shape[1]

    # 1) Pack: per-slab minor-dim transpose (W, L) -> (L, W) (XLU slot, not
    #    MXU/VALU), stored at static row offsets into the lane-dense LHS.
    for b in range(tb):
        xt_ref[pl.ds(b * L, L), :] = x_ref[b].T

    # 2) One wide MXU matmul for the whole tile: (tb*L, W) @ (W, V).
    y_ref[...] = jnp.dot(
        xt_ref[...], at_ref[...], preferred_element_type=jnp.float32
    )

    # 3) Unpack: un-transpose each (L, V) slab back to the required (V, L)
    #    layout only at the block store (kept lane-dense up to here).
    for b in range(tb):
        o_ref[b] = y_ref[pl.ds(b * L, L), :].T.astype(o_ref.dtype)


def _pick_block_b(B, W, V, L, itemsize, vmem_budget_bytes, max_block_b=128):
    """Largest slab count per grid step that fits the VMEM budget.

    Accounts for the lane padding of L up to 128 in the double-buffered
    input/output tiles plus the lane-dense scratch rows.
    """
    slab_in = _round_up(W, _SUBLANE) * _round_up(L, _LANE) * itemsize
    slab_out = _round_up(V, _SUBLANE) * _round_up(L, _LANE) * itemsize
    scratch = L * (_round_up(W, _LANE) * itemsize + _round_up(V, _LANE) * 4)
    per_b = 2 * (slab_in + slab_out) + scratch          # 2x = double buffering
    a_bytes = 2 * _round_up(W, _SUBLANE) * _round_up(V, _LANE) * itemsize
    tb = (vmem_budget_bytes - a_bytes) // per_b
    return int(max(1, min(tb, B, max_block_b)))


def nconv(x, A, *, block_b=None, vmem_budget_bytes=20 * 1024 * 1024):
    """einsum('ncwl,vw->ncvl', x, A) as a Pallas TPU kernel.

    x : (N, C, W, L) float32
    A : (V, W)       float32
    returns (N, C, V, L) float32
    """
    N, C, W, L = x.shape
    V, W2 = A.shape
    if W2 != W:
        raise ValueError("A's second dim must match x's node dim")

    B = N * C
    x_b = x.reshape(B, W, L)          # free reshape of contiguous NCWL
    a_t = jnp.transpose(A)            # (W, V): tiny one-off transpose

    if block_b is None:
        tb = _pick_block_b(B, W, V, L, x.dtype.itemsize, vmem_budget_bytes)
        nsteps = pl.cdiv(B, tb)
        if nsteps > 1 and nsteps % 2:     # even grid -> balances v7x's 2 TCs
            tb = pl.cdiv(B, nsteps + 1)
    else:
        tb = int(max(1, min(block_b, B)))
    grid = (pl.cdiv(B, tb),)              # ragged tail handled by Pallas masking

    itemsize = x.dtype.itemsize
    vmem_limit = int(
        min(48 * 1024 * 1024,
            max(32 * 1024 * 1024, vmem_budget_bytes + 16 * 1024 * 1024))
    )

    out = pl.pallas_call(
        _nconv_kernel,
        out_shape=jax.ShapeDtypeStruct((B, V, L), x.dtype),
        grid_spec=pltpu.PrefetchScalarGridSpec(
            num_scalar_prefetch=0,
            grid=grid,
            in_specs=[
                # full-extent (W, L) / (W, V) trailing dims -> exempt from the
                # (8,128) divisibility rule, no padding copies needed.
                pl.BlockSpec((tb, W, L), lambda i: (i, 0, 0)),
                pl.BlockSpec((W, V), lambda i: (0, 0)),   # A^T resident
            ],
            out_specs=pl.BlockSpec((tb, V, L), lambda i: (i, 0, 0)),
            scratch_shapes=[
                pltpu.VMEM((tb * L, W), x.dtype),        # packed LHS
                pltpu.VMEM((tb * L, V), jnp.float32),    # f32 matmul result
            ],
        ),
        compiler_params=pltpu.CompilerParams(
            dimension_semantics=("parallel",),
            vmem_limit_bytes=vmem_limit,
        ),
        cost_estimate=pl.CostEstimate(
            flops=2 * B * V * W * L,
            transcendentals=0,
            bytes_accessed=(B * W * L + V * W + B * V * L) * itemsize,
        ),
    )(x_b, a_t)

    # free reshape back to NCVL (already contiguous, matches .contiguous())
    return out.reshape(N, C, V, L)


if __name__ == "__main__":
    key = jax.random.PRNGKey(0)
    k_x, k_a = jax.random.split(key)

    # Small shapes consistent with MTGNN usage: (batch, channels, nodes, seq).
    N, C, NODES, L = 2, 4, 16, 12
    x = jax.random.normal(k_x, (N, C, NODES, L), jnp.float32)
    A = jax.random.normal(k_a, (NODES, NODES), jnp.float32)

    y_ref = jnp.einsum("ncwl,vw->ncvl", x, A)

    # 1) Auto block size (whole N*C extent fits in one grid step here).
    y = jax.jit(nconv)(x, A)
    jax.block_until_ready(y)
    assert y.shape == (N, C, NODES, L)
    assert jnp.allclose(y, y_ref, atol=1e-4, rtol=1e-4), "mismatch (auto tb)"

    # 2) Force a small block so the grid has several steps plus a ragged tail
    #    (B = 8 -> blocks of 3, 3, 2); exercises the partial-block masking.
    y2 = jax.jit(functools.partial(nconv, block_b=3))(x, A)
    jax.block_until_ready(y2)
    assert jnp.allclose(y2, y_ref, atol=1e-4, rtol=1e-4), "mismatch (ragged tb)"

    print("KERNEL_OK")
</pallas_src>

<mosaic_0001>
module attributes {stable_mosaic.version = 11 : i64} {
  func.func @_nconv_kernel(%arg0: i32, %arg1: memref<8x16x12xf32, #tpu.memory_space<vmem>>, %arg2: memref<16x16xf32, #tpu.memory_space<vmem>>, %arg3: memref<8x16x12xf32, #tpu.memory_space<vmem>>, %arg4: memref<96x16xf32, #tpu.memory_space<vmem>>, %arg5: memref<96x16xf32, #tpu.memory_space<vmem>>) attributes {dimension_semantics = [#tpu.dimension_semantics<parallel>], iteration_bounds = array<i64: 1>, scalar_prefetch = 0 : i64, scratch_operands = 2 : i64, tpu.core_type = #tpu.core_type<tc>, window_params = [{transform_indices = @transform_0, window_bounds = array<i64: 8, 16, 12>}, {pipeline_mode = #tpu.pipeline_mode<synchronous>, transform_indices = @transform_1, window_bounds = array<i64: 16, 16>}, {transform_indices = @transform_2, window_bounds = array<i64: 8, 16, 12>}]} {
    %c0 = arith.constant 0 : index
    %c0_0 = arith.constant 0 : index
    %c0_1 = arith.constant 0 : index
    %0 = vector.load %arg1[%c0, %c0_0, %c0_1] : memref<8x16x12xf32, #tpu.memory_space<vmem>>, vector<1x16x12xf32>
    %1 = vector.shape_cast %0 : vector<1x16x12xf32> to vector<16x12xf32>
    %2 = tpu.transpose %1, [1, 0] : vector<16x12xf32> -> vector<12x16xf32>
    %c0_2 = arith.constant 0 : index
    %c0_3 = arith.constant 0 : index
    %3 = vector.load %arg4[%c0_2, %c0_3] : memref<96x16xf32, #tpu.memory_space<vmem>>, vector<12x16xf32>
    tpu.vector_store %arg4[%c0_2, %c0_3], %2 {strides = array<i32>} : memref<96x16xf32, #tpu.memory_space<vmem>>, vector<12x16xf32>,
    %c1 = arith.constant 1 : index
    %c0_4 = arith.constant 0 : index
    %c0_5 = arith.constant 0 : index
    %4 = vector.load %arg1[%c1, %c0_4, %c0_5] : memref<8x16x12xf32, #tpu.memory_space<vmem>>, vector<1x16x12xf32>
    %5 = vector.shape_cast %4 : vector<1x16x12xf32> to vector<16x12xf32>
    %6 = tpu.transpose %5, [1, 0] : vector<16x12xf32> -> vector<12x16xf32>
    %c12 = arith.constant 12 : index
    %c0_6 = arith.constant 0 : index
    %7 = vector.load %arg4[%c12, %c0_6] : memref<96x16xf32, #tpu.memory_space<vmem>>, vector<12x16xf32>
    tpu.vector_store %arg4[%c12, %c0_6], %6 {strides = array<i32>} : memref<96x16xf32, #tpu.memory_space<vmem>>, vector<12x16xf32>,
    %c2 = arith.constant 2 : index
    %c0_7 = arith.constant 0 : index
    %c0_8 = arith.constant 0 : index
    %8 = vector.load %arg1[%c2, %c0_7, %c0_8] : memref<8x16x12xf32, #tpu.memory_space<vmem>>, vector<1x16x12xf32>
    %9 = vector.shape_cast %8 : vector<1x16x12xf32> to vector<16x12xf32>
    %10 = tpu.transpose %9, [1, 0] : vector<16x12xf32> -> vector<12x16xf32>
    %c24 = arith.constant 24 : index
    %c0_9 = arith.constant 0 : index
    %11 = vector.load %arg4[%c24, %c0_9] : memref<96x16xf32, #tpu.memory_space<vmem>>, vector<12x16xf32>
    tpu.vector_store %arg4[%c24, %c0_9], %10 {strides = array<i32>} : memref<96x16xf32, #tpu.memory_space<vmem>>, vector<12x16xf32>,
    %c3 = arith.constant 3 : index
    %c0_10 = arith.constant 0 : index
    %c0_11 = arith.constant 0 : index
    %12 = vector.load %arg1[%c3, %c0_10, %c0_11] : memref<8x16x12xf32, #tpu.memory_space<vmem>>, vector<1x16x12xf32>
    %13 = vector.shape_cast %12 : vector<1x16x12xf32> to vector<16x12xf32>
    %14 = tpu.transpose %13, [1, 0] : vector<16x12xf32> -> vector<12x16xf32>
    %c36 = arith.constant 36 : index
    %c0_12 = arith.constant 0 : index
    %15 = vector.load %arg4[%c36, %c0_12] : memref<96x16xf32, #tpu.memory_space<vmem>>, vector<12x16xf32>
    tpu.vector_store %arg4[%c36, %c0_12], %14 {strides = array<i32>} : memref<96x16xf32, #tpu.memory_space<vmem>>, vector<12x16xf32>,
    %c4 = arith.constant 4 : index
    %c0_13 = arith.constant 0 : index
    %c0_14 = arith.constant 0 : index
    %16 = vector.load %arg1[%c4, %c0_13, %c0_14] : memref<8x16x12xf32, #tpu.memory_space<vmem>>, vector<1x16x12xf32>
    %17 = vector.shape_cast %16 : vector<1x16x12xf32> to vector<16x12xf32>
    %18 = tpu.transpose %17, [1, 0] : vector<16x12xf32> -> vector<12x16xf32>
    %c48 = arith.constant 48 : index
    %c0_15 = arith.constant 0 : index
    %19 = vector.load %arg4[%c48, %c0_15] : memref<96x16xf32, #tpu.memory_space<vmem>>, vector<12x16xf32>
    tpu.vector_store %arg4[%c48, %c0_15], %18 {strides = array<i32>} : memref<96x16xf32, #tpu.memory_space<vmem>>, vector<12x16xf32>,
    %c5 = arith.constant 5 : index
    %c0_16 = arith.constant 0 : index
    %c0_17 = arith.constant 0 : index
    %20 = vector.load %arg1[%c5, %c0_16, %c0_17] : memref<8x16x12xf32, #tpu.memory_space<vmem>>, vector<1x16x12xf32>
    %21 = vector.shape_cast %20 : vector<1x16x12xf32> to vector<16x12xf32>
    %22 = tpu.transpose %21, [1, 0] : vector<16x12xf32> -> vector<12x16xf32>
    %c60 = arith.constant 60 : index
    %c0_18 = arith.constant 0 : index
    %23 = vector.load %arg4[%c60, %c0_18] : memref<96x16xf32, #tpu.memory_space<vmem>>, vector<12x16xf32>
    tpu.vector_store %arg4[%c60, %c0_18], %22 {strides = array<i32>} : memref<96x16xf32, #tpu.memory_space<vmem>>, vector<12x16xf32>,
    %c6 = arith.constant 6 : index
    %c0_19 = arith.constant 0 : index
    %c0_20 = arith.constant 0 : index
    %24 = vector.load %arg1[%c6, %c0_19, %c0_20] : memref<8x16x12xf32, #tpu.memory_space<vmem>>, vector<1x16x12xf32>
    %25 = vector.shape_cast %24 : vector<1x16x12xf32> to vector<16x12xf32>
    %26 = tpu.transpose %25, [1, 0] : vector<16x12xf32> -> vector<12x16xf32>
    %c72 = arith.constant 72 : index
    %c0_21 = arith.constant 0 : index
    %27 = vector.load %arg4[%c72, %c0_21] : memref<96x16xf32, #tpu.memory_space<vmem>>, vector<12x16xf32>
    tpu.vector_store %arg4[%c72, %c0_21], %26 {strides = array<i32>} : memref<96x16xf32, #tpu.memory_space<vmem>>, vector<12x16xf32>,
    %c7 = arith.constant 7 : index
    %c0_22 = arith.constant 0 : index
    %c0_23 = arith.constant 0 : index
    %28 = vector.load %arg1[%c7, %c0_22, %c0_23] : memref<8x16x12xf32, #tpu.memory_space<vmem>>, vector<1x16x12xf32>
    %29 = vector.shape_cast %28 : vector<1x16x12xf32> to vector<16x12xf32>
    %30 = tpu.transpose %29, [1, 0] : vector<16x12xf32> -> vector<12x16xf32>
    %c84 = arith.constant 84 : index
    %c0_24 = arith.constant 0 : index
    %31 = vector.load %arg4[%c84, %c0_24] : memref<96x16xf32, #tpu.memory_space<vmem>>, vector<12x16xf32>
    tpu.vector_store %arg4[%c84, %c0_24], %30 {strides = array<i32>} : memref<96x16xf32, #tpu.memory_space<vmem>>, vector<12x16xf32>,
    %c0_25 = arith.constant 0 : index
    %c0_26 = arith.constant 0 : index
    %32 = vector.load %arg4[%c0_25, %c0_26] : memref<96x16xf32, #tpu.memory_space<vmem>>, vector<96x16xf32>
    %c0_27 = arith.constant 0 : index
    %c0_28 = arith.constant 0 : index
    %33 = vector.load %arg2[%c0_27, %c0_28] : memref<16x16xf32, #tpu.memory_space<vmem>>, vector<16x16xf32>
    %cst = arith.constant dense<0.000000e+00> : vector<96x16xf32>
    %34 = tpu.matmul %32, %33, %cst {dimension_numbers = #tpu.dot_dimension_numbers<[1], [0], [0], [1], [0, 0, 1, 1], [], []>} : vector<96x16xf32>, vector<16x16xf32>, vector<96x16xf32> -> vector<96x16xf32>
    %c0_29 = arith.constant 0 : index
    %c0_30 = arith.constant 0 : index
    %35 = vector.load %arg5[%c0_29, %c0_30] : memref<96x16xf32, #tpu.memory_space<vmem>>, vector<96x16xf32>
    tpu.vector_store %arg5[%c0_29, %c0_30], %34 {strides = array<i32>} : memref<96x16xf32, #tpu.memory_space<vmem>>, vector<96x16xf32>,
    %c0_31 = arith.constant 0 : index
    %c0_32 = arith.constant 0 : index
    %36 = vector.load %arg5[%c0_31, %c0_32] : memref<96x16xf32, #tpu.memory_space<vmem>>, vector<12x16xf32>
    %37 = tpu.transpose %36, [1, 0] : vector<12x16xf32> -> vector<16x12xf32>
    %c0_33 = arith.constant 0 : index
    %c0_34 = arith.constant 0 : index
    %c0_35 = arith.constant 0 : index
    %38 = vector.load %arg3[%c0_33, %c0_34, %c0_35] : memref<8x16x12xf32, #tpu.memory_space<vmem>>, vector<1x16x12xf32>
    %39 = vector.shape_cast %38 : vector<1x16x12xf32> to vector<16x12xf32>
    %40 = vector.shape_cast %37 : vector<16x12xf32> to vector<1x16x12xf32>
    tpu.vector_store %arg3[%c0_33, %c0_34, %c0_35], %40 {strides = array<i32>} : memref<8x16x12xf32, #tpu.memory_space<vmem>>, vector<1x16x12xf32>,
    %c12_36 = arith.constant 12 : index
    %c0_37 = arith.constant 0 : index
    %41 = vector.load %arg5[%c12_36, %c0_37] : memref<96x16xf32, #tpu.memory_space<vmem>>, vector<12x16xf32>
    %42 = tpu.transpose %41, [1, 0] : vector<12x16xf32> -> vector<16x12xf32>
    %c1_38 = arith.constant 1 : index
    %c0_39 = arith.constant 0 : index
    %c0_40 = arith.constant 0 : index
    %43 = vector.load %arg3[%c1_38, %c0_39, %c0_40] : memref<8x16x12xf32, #tpu.memory_space<vmem>>, vector<1x16x12xf32>
    %44 = vector.shape_cast %43 : vector<1x16x12xf32> to vector<16x12xf32>
    %45 = vector.shape_cast %42 : vector<16x12xf32> to vector<1x16x12xf32>
    tpu.vector_store %arg3[%c1_38, %c0_39, %c0_40], %45 {strides = array<i32>} : memref<8x16x12xf32, #tpu.memory_space<vmem>>, vector<1x16x12xf32>,
    %c24_41 = arith.constant 24 : index
    %c0_42 = arith.constant 0 : index
    %46 = vector.load %arg5[%c24_41, %c0_42] : memref<96x16xf32, #tpu.memory_space<vmem>>, vector<12x16xf32>
    %47 = tpu.transpose %46, [1, 0] : vector<12x16xf32> -> vector<16x12xf32>
    %c2_43 = arith.constant 2 : index
    %c0_44 = arith.constant 0 : index
    %c0_45 = arith.constant 0 : index
    %48 = vector.load %arg3[%c2_43, %c0_44, %c0_45] : memref<8x16x12xf32, #tpu.memory_space<vmem>>, vector<1x16x12xf32>
    %49 = vector.shape_cast %48 : vector<1x16x12xf32> to vector<16x12xf32>
    %50 = vector.shape_cast %47 : vector<16x12xf32> to vector<1x16x12xf32>
    tpu.vector_store %arg3[%c2_43, %c0_44, %c0_45], %50 {strides = array<i32>} : memref<8x16x12xf32, #tpu.memory_space<vmem>>, vector<1x16x12xf32>,
    %c36_46 = arith.constant 36 : index
    %c0_47 = arith.constant 0 : index
    %51 = vector.load %arg5[%c36_46, %c0_47] : memref<96x16xf32, #tpu.memory_space<vmem>>, vector<12x16xf32>
    %52 = tpu.transpose %51, [1, 0] : vector<12x16xf32> -> vector<16x12xf32>
    %c3_48 = arith.constant 3 : index
    %c0_49 = arith.constant 0 : index
    %c0_50 = arith.constant 0 : index
    %53 = vector.load %arg3[%c3_48, %c0_49, %c0_50] : memref<8x16x12xf32, #tpu.memory_space<vmem>>, vector<1x16x12xf32>
    %54 = vector.shape_cast %53 : vector<1x16x12xf32> to vector<16x12xf32>
    %55 = vector.shape_cast %52 : vector<16x12xf32> to vector<1x16x12xf32>
    tpu.vector_store %arg3[%c3_48, %c0_49, %c0_50], %55 {strides = array<i32>} : memref<8x16x12xf32, #tpu.memory_space<vmem>>, vector<1x16x12xf32>,
    %c48_51 = arith.constant 48 : index
    %c0_52 = arith.constant 0 : index
    %56 = vector.load %arg5[%c48_51, %c0_52] : memref<96x16xf32, #tpu.memory_space<vmem>>, vector<12x16xf32>
    %57 = tpu.transpose %56, [1, 0] : vector<12x16xf32> -> vector<16x12xf32>
    %c4_53 = arith.constant 4 : index
    %c0_54 = arith.constant 0 : index
    %c0_55 = arith.constant 0 : index
    %58 = vector.load %arg3[%c4_53, %c0_54, %c0_55] : memref<8x16x12xf32, #tpu.memory_space<vmem>>, vector<1x16x12xf32>
    %59 = vector.shape_cast %58 : vector<1x16x12xf32> to vector<16x12xf32>
    %60 = vector.shape_cast %57 : vector<16x12xf32> to vector<1x16x12xf32>
    tpu.vector_store %arg3[%c4_53, %c0_54, %c0_55], %60 {strides = array<i32>} : memref<8x16x12xf32, #tpu.memory_space<vmem>>, vector<1x16x12xf32>,
    %c60_56 = arith.constant 60 : index
    %c0_57 = arith.constant 0 : index
    %61 = vector.load %arg5[%c60_56, %c0_57] : memref<96x16xf32, #tpu.memory_space<vmem>>, vector<12x16xf32>
    %62 = tpu.transpose %61, [1, 0] : vector<12x16xf32> -> vector<16x12xf32>
    %c5_58 = arith.constant 5 : index
    %c0_59 = arith.constant 0 : index
    %c0_60 = arith.constant 0 : index
    %63 = vector.load %arg3[%c5_58, %c0_59, %c0_60] : memref<8x16x12xf32, #tpu.memory_space<vmem>>, vector<1x16x12xf32>
    %64 = vector.shape_cast %63 : vector<1x16x12xf32> to vector<16x12xf32>
    %65 = vector.shape_cast %62 : vector<16x12xf32> to vector<1x16x12xf32>
    tpu.vector_store %arg3[%c5_58, %c0_59, %c0_60], %65 {strides = array<i32>} : memref<8x16x12xf32, #tpu.memory_space<vmem>>, vector<1x16x12xf32>,
    %c72_61 = arith.constant 72 : index
    %c0_62 = arith.constant 0 : index
    %66 = vector.load %arg5[%c72_61, %c0_62] : memref<96x16xf32, #tpu.memory_space<vmem>>, vector<12x16xf32>
    %67 = tpu.transpose %66, [1, 0] : vector<12x16xf32> -> vector<16x12xf32>
    %c6_63 = arith.constant 6 : index
    %c0_64 = arith.constant 0 : index
    %c0_65 = arith.constant 0 : index
    %68 = vector.load %arg3[%c6_63, %c0_64, %c0_65] : memref<8x16x12xf32, #tpu.memory_space<vmem>>, vector<1x16x12xf32>
    %69 = vector.shape_cast %68 : vector<1x16x12xf32> to vector<16x12xf32>
    %70 = vector.shape_cast %67 : vector<16x12xf32> to vector<1x16x12xf32>
    tpu.vector_store %arg3[%c6_63, %c0_64, %c0_65], %70 {strides = array<i32>} : memref<8x16x12xf32, #tpu.memory_space<vmem>>, vector<1x16x12xf32>,
    %c84_66 = arith.constant 84 : index
    %c0_67 = arith.constant 0 : index
    %71 = vector.load %arg5[%c84_66, %c0_67] : memref<96x16xf32, #tpu.memory_space<vmem>>, vector<12x16xf32>
    %72 = tpu.transpose %71, [1, 0] : vector<12x16xf32> -> vector<16x12xf32>
    %c7_68 = arith.constant 7 : index
    %c0_69 = arith.constant 0 : index
    %c0_70 = arith.constant 0 : index
    %73 = vector.load %arg3[%c7_68, %c0_69, %c0_70] : memref<8x16x12xf32, #tpu.memory_space<vmem>>, vector<1x16x12xf32>
    %74 = vector.shape_cast %73 : vector<1x16x12xf32> to vector<16x12xf32>
    %75 = vector.shape_cast %72 : vector<16x12xf32> to vector<1x16x12xf32>
    tpu.vector_store %arg3[%c7_68, %c0_69, %c0_70], %75 {strides = array<i32>} : memref<8x16x12xf32, #tpu.memory_space<vmem>>, vector<1x16x12xf32>,
    return
  }
  func.func @transform_0(%arg0: i32) -> (i32, i32, i32) {
    %c0_i32 = arith.constant 0 : i32
    %c0_i32_0 = arith.constant 0 : i32
    %c0_i32_1 = arith.constant 0 : i32
    return %arg0, %c0_i32, %c0_i32_0 : i32, i32, i32
  }
  func.func @transform_1(%arg0: i32) -> (i32, i32) {
    %c0_i32 = arith.constant 0 : i32
    %c0_i32_0 = arith.constant 0 : i32
    %c0_i32_1 = arith.constant 0 : i32
    return %c0_i32, %c0_i32_0 : i32, i32
  }
  func.func @transform_2(%arg0: i32) -> (i32, i32, i32) {
    %c0_i32 = arith.constant 0 : i32
    %c0_i32_0 = arith.constant 0 : i32
    %c0_i32_1 = arith.constant 0 : i32
    return %arg0, %c0_i32, %c0_i32_0 : i32, i32, i32
  }
}

</mosaic_0001>

<llo_original>
// kernel: nconv.1
$region0: #{nconv.1}
  #allocation0 [shape = 'u32[]', space=smem, size = 0x4, offset = 0x4, fixed_abs, tag = 'smem constant byte address 0x4 - core index']
  #allocation1 [shape = 'u32[144,128]{1,0:T(1,128)}', space=vmem, size = 0x12000, scoped, tag = 'internal scratch']
  #allocation2 [shape = 'f32[96,16]{1,0:T(8,128)}', space=vmem, size = 0xc000, scoped, tag = 'scratch operand']
  #allocation3 [shape = 'f32[96,16]{1,0:T(8,128)}', space=vmem, size = 0xc000, scoped, tag = 'scratch operand']
  %s0 = inlined_call_operand.vmem [shape: f32[8,16,12], index: 0, kind: input, shape index: {}]
  %s1 = inlined_call_operand.vmem [shape: f32[16,16], index: 1, kind: input, shape index: {}]
  %s2 = inlined_call_operand.vmem [shape: f32[8,16,12], index: 2, kind: output, shape index: {}]
  %s3 = sld [smem:[#allocation0]]
  $region18: #{nconv.1} parent=0
    _
  %s5 = ssub.s32 1, %s3
  %s6 = scalar_select 0, %s5, %s3
  // Predicated region
  $region2: #{nconv.1} parent=0 // pred_check
    _
  $region3: #{nconv.1} parent=0 // pred_check_branch
    %8 = sbr.rel (0) target = $region5
  $region4: #{nconv.1} parent=0 // pred_region
    _
  $region5: #{nconv.1} parent=0 // pred_fallthru
    _
  // Predicated region
  $region6: #{nconv.1} parent=0 // pred_check
    _
  $region7: #{nconv.1} parent=0 // pred_check_branch
    %10 = sbr.rel (0) target = $region9
  $region8: #{nconv.1} parent=0 // pred_region
    _
  $region9: #{nconv.1} parent=0 // pred_fallthru
    _
  %v11 = vld [vmem:[%s0] sm:$0xff]
  %v12 = vld [vmem:[%s0 + $0x8] sm:$0xff]
  %13 = vxpose.xlu0.b32.start [1/16] %v11, 128
  %14 = vxpose.xlu0.b32.cont [2/16] %v12, 128
  %15 = vxpose.xlu0.b32.cont [3/16] 0.0, 128
  %16 = vxpose.xlu0.b32.cont [4/16] 0.0, 128
  %17 = vxpose.xlu0.b32.cont [5/16] 0.0, 128
  %18 = vxpose.xlu0.b32.cont [6/16] 0.0, 128
  %19 = vxpose.xlu0.b32.cont [7/16] 0.0, 128
  %20 = vxpose.xlu0.b32.cont [8/16] 0.0, 128
  %21 = vxpose.xlu0.b32.cont [9/16] 0.0, 128
  %22 = vxpose.xlu0.b32.cont [10/16] 0.0, 128
  %23 = vxpose.xlu0.b32.cont [11/16] 0.0, 128
  %24 = vxpose.xlu0.b32.cont [12/16] 0.0, 128
  %25 = vxpose.xlu0.b32.cont [13/16] 0.0, 128
  %26 = vxpose.xlu0.b32.cont [14/16] 0.0, 128
  %27 = vxpose.xlu0.b32.cont [15/16] 0.0, 128
  %28 = vxpose.xlu0.b32.end [16/16] 0.0, 128
  %v29 = vpop.trf.xlu0
  %v30 = vpop.trf.xlu0
  %v31 = vpop.trf.xlu0
  %v32 = vpop.trf.xlu0
  %v33 = vpop.trf.xlu0
  %v34 = vpop.trf.xlu0
  %v35 = vpop.trf.xlu0
  %v36 = vpop.trf.xlu0
  %v37 = vpop.trf.xlu0
  %v38 = vpop.trf.xlu0
  %v39 = vpop.trf.xlu0
  %v40 = vpop.trf.xlu0
  %v41 = vpop.trf.xlu0
  %v42 = vpop.trf.xlu0
  %v43 = vpop.trf.xlu0
  %v44 = vpop.trf.xlu0
  %vm45 = vcmask 130048
  %46 = vst.msk [vmem:[#allocation2] sm:$0xff] %vm45, %v29
  %vm47 = vcmask 125952
  %48 = vst.msk [vmem:[#allocation2 + $0x8] sm:$0xf] %vm47, %v30
  %s49 = scalar_lea.vmem %s0, 16
  %v50 = vld [vmem:[%s49] sm:$0xff]
  %v51 = vld [vmem:[%s49 + $0x8] sm:$0xff]
  %52 = vxpose.xlu0.b32.start [1/16] %v50, 128
  %53 = vxpose.xlu0.b32.cont [2/16] %v51, 128
  %54 = vxpose.xlu0.b32.cont [3/16] 0.0, 128
  %55 = vxpose.xlu0.b32.cont [4/16] 0.0, 128
  %56 = vxpose.xlu0.b32.cont [5/16] 0.0, 128
  %57 = vxpose.xlu0.b32.cont [6/16] 0.0, 128
  %58 = vxpose.xlu0.b32.cont [7/16] 0.0, 128
  %59 = vxpose.xlu0.b32.cont [8/16] 0.0, 128
  %60 = vxpose.xlu0.b32.cont [9/16] 0.0, 128
  %61 = vxpose.xlu0.b32.cont [10/16] 0.0, 128
  %62 = vxpose.xlu0.b32.cont [11/16] 0.0, 128
  %63 = vxpose.xlu0.b32.cont [12/16] 0.0, 128
  %64 = vxpose.xlu0.b32.cont [13/16] 0.0, 128
  %65 = vxpose.xlu0.b32.cont [14/16] 0.0, 128
  %66 = vxpose.xlu0.b32.cont [15/16] 0.0, 128
  %67 = vxpose.xlu0.b32.end [16/16] 0.0, 128
  %v68 = vpop.trf.xlu0
  %v69 = vpop.trf.xlu0
  %v70 = vpop.trf.xlu0
  %v71 = vpop.trf.xlu0
  %v72 = vpop.trf.xlu0
  %v73 = vpop.trf.xlu0
  %v74 = vpop.trf.xlu0
  %v75 = vpop.trf.xlu0
  %v76 = vpop.trf.xlu0
  %v77 = vpop.trf.xlu0
  %v78 = vpop.trf.xlu0
  %v79 = vpop.trf.xlu0
  %v80 = vpop.trf.xlu0
  %v81 = vpop.trf.xlu0
  %v82 = vpop.trf.xlu0
  %v83 = vpop.trf.xlu0
  %84 = vst.msk [vmem:[#allocation2 + $0xc] sm:$0xff] %vm45, %v68
  %85 = vst.msk [vmem:[#allocation2 + $0x14] sm:$0xf] %vm47, %v69
  %s86 = scalar_lea.vmem %s0, 32
  %v87 = vld [vmem:[%s86] sm:$0xff]
  %v88 = vld [vmem:[%s86 + $0x8] sm:$0xff]
  %89 = vxpose.xlu0.b32.start [1/16] %v87, 128
  %90 = vxpose.xlu0.b32.cont [2/16] %v88, 128
  %91 = vxpose.xlu0.b32.cont [3/16] 0.0, 128
  %92 = vxpose.xlu0.b32.cont [4/16] 0.0, 128
  %93 = vxpose.xlu0.b32.cont [5/16] 0.0, 128
  %94 = vxpose.xlu0.b32.cont [6/16] 0.0, 128
  %95 = vxpose.xlu0.b32.cont [7/16] 0.0, 128
  %96 = vxpose.xlu0.b32.cont [8/16] 0.0, 128
  %97 = vxpose.xlu0.b32.cont [9/16] 0.0, 128
  %98 = vxpose.xlu0.b32.cont [10/16] 0.0, 128
  %99 = vxpose.xlu0.b32.cont [11/16] 0.0, 128
  %100 = vxpose.xlu0.b32.cont [12/16] 0.0, 128
  %101 = vxpose.xlu0.b32.cont [13/16] 0.0, 128
  %102 = vxpose.xlu0.b32.cont [14/16] 0.0, 128
  %103 = vxpose.xlu0.b32.cont [15/16] 0.0, 128
  %104 = vxpose.xlu0.b32.end [16/16] 0.0, 128
  %v105 = vpop.trf.xlu0
  %v106 = vpop.trf.xlu0
  %v107 = vpop.trf.xlu0
  %v108 = vpop.trf.xlu0
  %v109 = vpop.trf.xlu0
  %v110 = vpop.trf.xlu0
  %v111 = vpop.trf.xlu0
  %v112 = vpop.trf.xlu0
  %v113 = vpop.trf.xlu0
  %v114 = vpop.trf.xlu0
  %v115 = vpop.trf.xlu0
  %v116 = vpop.trf.xlu0
  %v117 = vpop.trf.xlu0
  %v118 = vpop.trf.xlu0
  %v119 = vpop.trf.xlu0
  %v120 = vpop.trf.xlu0
  %121 = vst.msk [vmem:[#allocation2 + $0x18] sm:$0xff] %vm45, %v105
  %122 = vst.msk [vmem:[#allocation2 + $0x20] sm:$0xf] %vm47, %v106
  %s123 = scalar_lea.vmem %s0, 48
  %v124 = vld [vmem:[%s123] sm:$0xff]
  %v125 = vld [vmem:[%s123 + $0x8] sm:$0xff]
  %126 = vxpose.xlu0.b32.start [1/16] %v124, 128
  %127 = vxpose.xlu0.b32.cont [2/16] %v125, 128
  %128 = vxpose.xlu0.b32.cont [3/16] 0.0, 128
  %129 = vxpose.xlu0.b32.cont [4/16] 0.0, 128
  %130 = vxpose.xlu0.b32.cont [5/16] 0.0, 128
  %131 = vxpose.xlu0.b32.cont [6/16] 0.0, 128
  %132 = vxpose.xlu0.b32.cont [7/16] 0.0, 128
  %133 = vxpose.xlu0.b32.cont [8/16] 0.0, 128
  %134 = vxpose.xlu0.b32.cont [9/16] 0.0, 128
  %135 = vxpose.xlu0.b32.cont [10/16] 0.0, 128
  %136 = vxpose.xlu0.b32.cont [11/16] 0.0, 128
  %137 = vxpose.xlu0.b32.cont [12/16] 0.0, 128
  %138 = vxpose.xlu0.b32.cont [13/16] 0.0, 128
  %139 = vxpose.xlu0.b32.cont [14/16] 0.0, 128
  %140 = vxpose.xlu0.b32.cont [15/16] 0.0, 128
  %141 = vxpose.xlu0.b32.end [16/16] 0.0, 128
  %v142 = vpop.trf.xlu0
  %v143 = vpop.trf.xlu0
  %v144 = vpop.trf.xlu0
  %v145 = vpop.trf.xlu0
  %v146 = vpop.trf.xlu0
  %v147 = vpop.trf.xlu0
  %v148 = vpop.trf.xlu0
  %v149 = vpop.trf.xlu0
  %v150 = vpop.trf.xlu0
  %v151 = vpop.trf.xlu0
  %v152 = vpop.trf.xlu0
  %v153 = vpop.trf.xlu0
  %v154 = vpop.trf.xlu0
  %v155 = vpop.trf.xlu0
  %v156 = vpop.trf.xlu0
  %v157 = vpop.trf.xlu0
  %158 = vst.msk [vmem:[#allocation2 + $0x24] sm:$0xff] %vm45, %v142
  %159 = vst.msk [vmem:[#allocation2 + $0x2c] sm:$0xf] %vm47, %v143
  %s160 = scalar_lea.vmem %s0, 64
  %v161 = vld [vmem:[%s160] sm:$0xff]
  %v162 = vld [vmem:[%s160 + $0x8] sm:$0xff]
  %163 = vxpose.xlu0.b32.start [1/16] %v161, 128
  %164 = vxpose.xlu0.b32.cont [2/16] %v162, 128
  %165 = vxpose.xlu0.b32.cont [3/16] 0.0, 128
  %166 = vxpose.xlu0.b32.cont [4/16] 0.0, 128
  %167 = vxpose.xlu0.b32.cont [5/16] 0.0, 128
  %168 = vxpose.xlu0.b32.cont [6/16] 0.0, 128
  %169 = vxpose.xlu0.b32.cont [7/16] 0.0, 128
  %170 = vxpose.xlu0.b32.cont [8/16] 0.0, 128
  %171 = vxpose.xlu0.b32.cont [9/16] 0.0, 128
  %172 = vxpose.xlu0.b32.cont [10/16] 0.0, 128
  %173 = vxpose.xlu0.b32.cont [11/16] 0.0, 128
  %174 = vxpose.xlu0.b32.cont [12/16] 0.0, 128
  %175 = vxpose.xlu0.b32.cont [13/16] 0.0, 128
  %176 = vxpose.xlu0.b32.cont [14/16] 0.0, 128
  %177 = vxpose.xlu0.b32.cont [15/16] 0.0, 128
  %178 = vxpose.xlu0.b32.end [16/16] 0.0, 128
  %v179 = vpop.trf.xlu0
  %v180 = vpop.trf.xlu0
  %v181 = vpop.trf.xlu0
  %v182 = vpop.trf.xlu0
  %v183 = vpop.trf.xlu0
  %v184 = vpop.trf.xlu0
  %v185 = vpop.trf.xlu0
  %v186 = vpop.trf.xlu0
  %v187 = vpop.trf.xlu0
  %v188 = vpop.trf.xlu0
  %v189 = vpop.trf.xlu0
  %v190 = vpop.trf.xlu0
  %v191 = vpop.trf.xlu0
  %v192 = vpop.trf.xlu0
  %v193 = vpop.trf.xlu0
  %v194 = vpop.trf.xlu0
  %195 = vst.msk [vmem:[#allocation2 + $0x30] sm:$0xff] %vm45, %v179
  %196 = vst.msk [vmem:[#allocation2 + $0x38] sm:$0xf] %vm47, %v180
  %s197 = scalar_lea.vmem %s0, 80
  %v198 = vld [vmem:[%s197] sm:$0xff]
  %v199 = vld [vmem:[%s197 + $0x8] sm:$0xff]
  %200 = vxpose.xlu0.b32.start [1/16] %v198, 128
  %201 = vxpose.xlu0.b32.cont [2/16] %v199, 128
  %202 = vxpose.xlu0.b32.cont [3/16] 0.0, 128
  %203 = vxpose.xlu0.b32.cont [4/16] 0.0, 128
  %204 = vxpose.xlu0.b32.cont [5/16] 0.0, 128
  %205 = vxpose.xlu0.b32.cont [6/16] 0.0, 128
  %206 = vxpose.xlu0.b32.cont [7/16] 0.0, 128
  %207 = vxpose.xlu0.b32.cont [8/16] 0.0, 128
  %208 = vxpose.xlu0.b32.cont [9/16] 0.0, 128
  %209 = vxpose.xlu0.b32.cont [10/16] 0.0, 128
  %210 = vxpose.xlu0.b32.cont [11/16] 0.0, 128
  %211 = vxpose.xlu0.b32.cont [12/16] 0.0, 128
  %212 = vxpose.xlu0.b32.cont [13/16] 0.0, 128
  %213 = vxpose.xlu0.b32.cont [14/16] 0.0, 128
  %214 = vxpose.xlu0.b32.cont [15/16] 0.0, 128
  %215 = vxpose.xlu0.b32.end [16/16] 0.0, 128
  %v216 = vpop.trf.xlu0
  %v217 = vpop.trf.xlu0
  %v218 = vpop.trf.xlu0
  %v219 = vpop.trf.xlu0
  %v220 = vpop.trf.xlu0
  %v221 = vpop.trf.xlu0
  %v222 = vpop.trf.xlu0
  %v223 = vpop.trf.xlu0
  %v224 = vpop.trf.xlu0
  %v225 = vpop.trf.xlu0
  %v226 = vpop.trf.xlu0
  %v227 = vpop.trf.xlu0
  %v228 = vpop.trf.xlu0
  %v229 = vpop.trf.xlu0
  %v230 = vpop.trf.xlu0
  %v231 = vpop.trf.xlu0
  %232 = vst.msk [vmem:[#allocation2 + $0x3c] sm:$0xff] %vm45, %v216
  %233 = vst.msk [vmem:[#allocation2 + $0x44] sm:$0xf] %vm47, %v217
  %s234 = scalar_lea.vmem %s0, 96
  %v235 = vld [vmem:[%s234] sm:$0xff]
  %v236 = vld [vmem:[%s234 + $0x8] sm:$0xff]
  %237 = vxpose.xlu0.b32.start [1/16] %v235, 128
  %238 = vxpose.xlu0.b32.cont [2/16] %v236, 128
  %239 = vxpose.xlu0.b32.cont [3/16] 0.0, 128
  %240 = vxpose.xlu0.b32.cont [4/16] 0.0, 128
  %241 = vxpose.xlu0.b32.cont [5/16] 0.0, 128
  %242 = vxpose.xlu0.b32.cont [6/16] 0.0, 128
  %243 = vxpose.xlu0.b32.cont [7/16] 0.0, 128
  %244 = vxpose.xlu0.b32.cont [8/16] 0.0, 128
  %245 = vxpose.xlu0.b32.cont [9/16] 0.0, 128
  %246 = vxpose.xlu0.b32.cont [10/16] 0.0, 128
  %247 = vxpose.xlu0.b32.cont [11/16] 0.0, 128
  %248 = vxpose.xlu0.b32.cont [12/16] 0.0, 128
  %249 = vxpose.xlu0.b32.cont [13/16] 0.0, 128
  %250 = vxpose.xlu0.b32.cont [14/16] 0.0, 128
  %251 = vxpose.xlu0.b32.cont [15/16] 0.0, 128
  %252 = vxpose.xlu0.b32.end [16/16] 0.0, 128
  %v253 = vpop.trf.xlu0
  %v254 = vpop.trf.xlu0
  %v255 = vpop.trf.xlu0
  %v256 = vpop.trf.xlu0
  %v257 = vpop.trf.xlu0
  %v258 = vpop.trf.xlu0
  %v259 = vpop.trf.xlu0
  %v260 = vpop.trf.xlu0
  %v261 = vpop.trf.xlu0
  %v262 = vpop.trf.xlu0
  %v263 = vpop.trf.xlu0
  %v264 = vpop.trf.xlu0
  %v265 = vpop.trf.xlu0
  %v266 = vpop.trf.xlu0
  %v267 = vpop.trf.xlu0
  %v268 = vpop.trf.xlu0
  %269 = vst.msk [vmem:[#allocation2 + $0x48] sm:$0xff] %vm45, %v253
  %270 = vst.msk [vmem:[#allocation2 + $0x50] sm:$0xf] %vm47, %v254
  %s271 = scalar_lea.vmem %s0, 112
  %v272 = vld [vmem:[%s271] sm:$0xff]
  %v273 = vld [vmem:[%s271 + $0x8] sm:$0xff]
  %274 = vxpose.xlu0.b32.start [1/16] %v272, 128
  %275 = vxpose.xlu0.b32.cont [2/16] %v273, 128
  %276 = vxpose.xlu0.b32.cont [3/16] 0.0, 128
  %277 = vxpose.xlu0.b32.cont [4/16] 0.0, 128
  %278 = vxpose.xlu0.b32.cont [5/16] 0.0, 128
  %279 = vxpose.xlu0.b32.cont [6/16] 0.0, 128
  %280 = vxpose.xlu0.b32.cont [7/16] 0.0, 128
  %281 = vxpose.xlu0.b32.cont [8/16] 0.0, 128
  %282 = vxpose.xlu0.b32.cont [9/16] 0.0, 128
  %283 = vxpose.xlu0.b32.cont [10/16] 0.0, 128
  %284 = vxpose.xlu0.b32.cont [11/16] 0.0, 128
  %285 = vxpose.xlu0.b32.cont [12/16] 0.0, 128
  %286 = vxpose.xlu0.b32.cont [13/16] 0.0, 128
  %287 = vxpose.xlu0.b32.cont [14/16] 0.0, 128
  %288 = vxpose.xlu0.b32.cont [15/16] 0.0, 128
  %289 = vxpose.xlu0.b32.end [16/16] 0.0, 128
  %v290 = vpop.trf.xlu0
  %v291 = vpop.trf.xlu0
  %v292 = vpop.trf.xlu0
  %v293 = vpop.trf.xlu0
  %v294 = vpop.trf.xlu0
  %v295 = vpop.trf.xlu0
  %v296 = vpop.trf.xlu0
  %v297 = vpop.trf.xlu0
  %v298 = vpop.trf.xlu0
  %v299 = vpop.trf.xlu0
  %v300 = vpop.trf.xlu0
  %v301 = vpop.trf.xlu0
  %v302 = vpop.trf.xlu0
  %v303 = vpop.trf.xlu0
  %v304 = vpop.trf.xlu0
  %v305 = vpop.trf.xlu0
  %306 = vst.msk [vmem:[#allocation2 + $0x54] sm:$0xff] %vm45, %v290
  %307 = vst.msk [vmem:[#allocation2 + $0x5c] sm:$0xf] %vm47, %v291
  %v308 = vld [vmem:[#allocation2] sm:$0xff]
  %v309 = vld [vmem:[#allocation2 + $0x8] sm:$0xff]
  %v310 = vld [vmem:[#allocation2 + $0x10] sm:$0xff]
  %v311 = vld [vmem:[#allocation2 + $0x18] sm:$0xff]
  %v312 = vld [vmem:[#allocation2 + $0x20] sm:$0xff]
  %v313 = vld [vmem:[#allocation2 + $0x28] sm:$0xff]
  %v314 = vld [vmem:[#allocation2 + $0x30] sm:$0xff]
  %v315 = vld [vmem:[#allocation2 + $0x38] sm:$0xff]
  %v316 = vld [vmem:[#allocation2 + $0x40] sm:$0xff]
  %v317 = vld [vmem:[#allocation2 + $0x48] sm:$0xff]
  %v318 = vld [vmem:[#allocation2 + $0x50] sm:$0xff]
  %v319 = vld [vmem:[#allocation2 + $0x58] sm:$0xff]
  %v320 = vld [vmem:[%s1] sm:$0xff]
  %v321 = vld [vmem:[%s1 + $0x8] sm:$0xff]
  %v323 = vsel %vm45, %v308, 0
  %v326 = vsel %vm45, %v309, 0
  %v329 = vsel %vm45, %v310, 0
  %v332 = vsel %vm45, %v311, 0
  %v335 = vsel %vm45, %v312, 0
  %v338 = vsel %vm45, %v313, 0
  %v341 = vsel %vm45, %v314, 0
  %v344 = vsel %vm45, %v315, 0
  %v347 = vsel %vm45, %v316, 0
  %v350 = vsel %vm45, %v317, 0
  %v353 = vsel %vm45, %v318, 0
  %v356 = vsel %vm45, %v319, 0
  %358 = vmatprep.subr.mxu0 0.0
  %359 = vmatpush1.msra.mxu0 %v320
  %360 = vmatprep.subr.mxu0 0.0
  %361 = vmatpush1.msra.mxu0 %v321
  %362 = vmatprep.subr.mxu0 0.0
  %363 = vmatpush1.msra.mxu0 0.0
  %364 = vmatprep.subr.mxu0 0.0
  %365 = vmatpush1.msra.mxu0 0.0
  %366 = vmatprep.subr.mxu0 0.0
  %367 = vmatpush1.msra.mxu0 0.0
  %368 = vmatprep.subr.mxu0 0.0
  %369 = vmatpush1.msra.mxu0 0.0
  %370 = vmatprep.subr.mxu0 0.0
  %371 = vmatpush1.msra.mxu0 0.0
  %372 = vmatprep.subr.mxu0 0.0
  %373 = vmatpush1.msra.mxu0 0.0
  %374 = vmatprep.subr.mxu0 0.0
  %375 = vmatpush1.msra.mxu0 0.0
  %376 = vmatprep.subr.mxu0 0.0
  %377 = vmatpush1.msra.mxu0 0.0
  %378 = vmatprep.subr.mxu0 0.0
  %379 = vmatpush1.msra.mxu0 0.0
  %380 = vmatprep.subr.mxu0 0.0
  %381 = vmatpush1.msra.mxu0 0.0
  %382 = vmatprep.subr.mxu0 0.0
  %383 = vmatpush1.msra.mxu0 0.0
  %384 = vmatprep.subr.mxu0 0.0
  %385 = vmatpush1.msra.mxu0 0.0
  %386 = vmatprep.subr.mxu0 0.0
  %387 = vmatpush1.msra.mxu0 0.0
  %388 = vmatprep.subr.mxu0 0.0
  %389 = vmatpush1.msra.mxu0 0.0
  %390 = vmatprep.subr.mxu0 0.0
  %391 = vmatpush1.msra.mxu0 0.0
  %392 = vmatprep.subr.mxu0 0.0
  %393 = vmatpush1.msra.mxu0 0.0
  %394 = vmatprep.subr.mxu0 0.0
  %395 = vmatpush1.msra.mxu0 0.0
  %396 = vmatprep.subr.mxu0 0.0
  %397 = vmatpush1.msra.mxu0 0.0
  %398 = vmatprep.subr.mxu0 0.0
  %399 = vmatpush1.msra.mxu0 0.0
  %400 = vmatprep.subr.mxu0 0.0
  %401 = vmatpush1.msra.mxu0 0.0
  %402 = vmatprep.subr.mxu0 0.0
  %403 = vmatpush1.msra.mxu0 0.0
  %404 = vmatprep.subr.mxu0 0.0
  %405 = vmatpush1.msra.mxu0 0.0
  %406 = vmatprep.subr.mxu0 0.0
  %407 = vmatpush1.msra.mxu0 0.0
  %408 = vmatprep.subr.mxu0 0.0
  %409 = vmatpush1.msra.mxu0 0.0
  %410 = vmatprep.subr.mxu0 0.0
  %411 = vmatpush1.msra.mxu0 0.0
  %412 = vmatprep.subr.mxu0 0.0
  %413 = vmatpush1.msra.mxu0 0.0
  %414 = vmatprep.subr.mxu0 0.0
  %415 = vmatpush1.msra.mxu0 0.0
  %416 = vmatprep.subr.mxu0 0.0
  %417 = vmatpush1.msra.mxu0 0.0
  %418 = vmatprep.subr.mxu0 0.0
  %419 = vmatpush1.msra.mxu0 0.0
  %420 = vmatprep.subr.mxu0 0.0
  %421 = vmatpush1.msra.mxu0 0.0
  %422 = vmatprep.mubr.f32.mxu0 0.0
  %423 = vmatmul.mubr.f32.gmra.mrb[0].mxu0 %v323
  %v424 = vpop.f32.mrb[0].mxu0
  %v425 = vadd.f32 0.0, %v424
  %v426 = vpop.f32.mrb[0].mxu0
  %427 = vmatprep.mubr.f32.mxu0 0.0
  %428 = vmatmul.mubr.f32.gmra.mrb[0].mxu0 %v326
  %v429 = vpop.f32.mrb[0].mxu0
  %v430 = vadd.f32 0.0, %v429
  %v431 = vpop.f32.mrb[0].mxu0
  %432 = vmatprep.mubr.f32.mxu0 0.0
  %433 = vmatmul.mubr.f32.gmra.mrb[0].mxu0 %v329
  %v434 = vpop.f32.mrb[0].mxu0
  %v435 = vadd.f32 0.0, %v434
  %v436 = vpop.f32.mrb[0].mxu0
  %437 = vmatprep.mubr.f32.mxu0 0.0
  %438 = vmatmul.mubr.f32.gmra.mrb[0].mxu0 %v332
  %v439 = vpop.f32.mrb[0].mxu0
  %v440 = vadd.f32 0.0, %v439
  %v441 = vpop.f32.mrb[0].mxu0
  %442 = vmatprep.mubr.f32.mxu0 0.0
  %443 = vmatmul.mubr.f32.gmra.mrb[0].mxu0 %v335
  %v444 = vpop.f32.mrb[0].mxu0
  %v445 = vadd.f32 0.0, %v444
  %v446 = vpop.f32.mrb[0].mxu0
  %447 = vmatprep.mubr.f32.mxu0 0.0
  %448 = vmatmul.mubr.f32.gmra.mrb[0].mxu0 %v338
  %v449 = vpop.f32.mrb[0].mxu0
  %v450 = vadd.f32 0.0, %v449
  %v451 = vpop.f32.mrb[0].mxu0
  %452 = vmatprep.mubr.f32.mxu0 0.0
  %453 = vmatmul.mubr.f32.gmra.mrb[0].mxu0 %v341
  %v454 = vpop.f32.mrb[0].mxu0
  %v455 = vadd.f32 0.0, %v454
  %v456 = vpop.f32.mrb[0].mxu0
  %457 = vmatprep.mubr.f32.mxu0 0.0
  %458 = vmatmul.mubr.f32.gmra.mrb[0].mxu0 %v344
  %v459 = vpop.f32.mrb[0].mxu0
  %v460 = vadd.f32 0.0, %v459
  %v461 = vpop.f32.mrb[0].mxu0
  %462 = vmatprep.mubr.f32.mxu0 0.0
  %463 = vmatmul.mubr.f32.gmra.mrb[0].mxu0 %v347
  %v464 = vpop.f32.mrb[0].mxu0
  %v465 = vadd.f32 0.0, %v464
  %v466 = vpop.f32.mrb[0].mxu0
  %467 = vmatprep.mubr.f32.mxu0 0.0
  %468 = vmatmul.mubr.f32.gmra.mrb[0].mxu0 %v350
  %v469 = vpop.f32.mrb[0].mxu0
  %v470 = vadd.f32 0.0, %v469
  %v471 = vpop.f32.mrb[0].mxu0
  %472 = vmatprep.mubr.f32.mxu0 0.0
  %473 = vmatmul.mubr.f32.gmra.mrb[0].mxu0 %v353
  %v474 = vpop.f32.mrb[0].mxu0
  %v475 = vadd.f32 0.0, %v474
  %v476 = vpop.f32.mrb[0].mxu0
  %477 = vmatprep.mubr.f32.mxu0 0.0
  %478 = vmatmul.mubr.f32.gmra.mrb[0].mxu0 %v356
  %v479 = vpop.f32.mrb[0].mxu0
  %v480 = vadd.f32 0.0, %v479
  %v481 = vpop.f32.mrb[0].mxu0
  %482 = vdwg.mxu0
  %483 = vst.msk [vmem:[#allocation3] sm:$0xff] %vm45, %v425
  %484 = vst.msk [vmem:[#allocation3 + $0x8] sm:$0xff] %vm45, %v430
  %485 = vst.msk [vmem:[#allocation3 + $0x10] sm:$0xff] %vm45, %v435
  %486 = vst.msk [vmem:[#allocation3 + $0x18] sm:$0xff] %vm45, %v440
  %487 = vst.msk [vmem:[#allocation3 + $0x20] sm:$0xff] %vm45, %v445
  %488 = vst.msk [vmem:[#allocation3 + $0x28] sm:$0xff] %vm45, %v450
  %489 = vst.msk [vmem:[#allocation3 + $0x30] sm:$0xff] %vm45, %v455
  %490 = vst.msk [vmem:[#allocation3 + $0x38] sm:$0xff] %vm45, %v460
  %491 = vst.msk [vmem:[#allocation3 + $0x40] sm:$0xff] %vm45, %v465
  %492 = vst.msk [vmem:[#allocation3 + $0x48] sm:$0xff] %vm45, %v470
  %493 = vst.msk [vmem:[#allocation3 + $0x50] sm:$0xff] %vm45, %v475
  %494 = vst.msk [vmem:[#allocation3 + $0x58] sm:$0xff] %vm45, %v480
  %v495 = vld [vmem:[#allocation3] sm:$0xff]
  %v496 = vld [vmem:[#allocation3 + $0x8] sm:$0xf]
  %497 = vxpose.xlu0.b32.start [1/16] %v495, 128
  %498 = vxpose.xlu0.b32.cont [2/16] %v496, 128
  %499 = vxpose.xlu0.b32.cont [3/16] 0.0, 128
  %500 = vxpose.xlu0.b32.cont [4/16] 0.0, 128
  %501 = vxpose.xlu0.b32.cont [5/16] 0.0, 128
  %502 = vxpose.xlu0.b32.cont [6/16] 0.0, 128
  %503 = vxpose.xlu0.b32.cont [7/16] 0.0, 128
  %504 = vxpose.xlu0.b32.cont [8/16] 0.0, 128
  %505 = vxpose.xlu0.b32.cont [9/16] 0.0, 128
  %506 = vxpose.xlu0.b32.cont [10/16] 0.0, 128
  %507 = vxpose.xlu0.b32.cont [11/16] 0.0, 128
  %508 = vxpose.xlu0.b32.cont [12/16] 0.0, 128
  %509 = vxpose.xlu0.b32.cont [13/16] 0.0, 128
  %510 = vxpose.xlu0.b32.cont [14/16] 0.0, 128
  %511 = vxpose.xlu0.b32.cont [15/16] 0.0, 128
  %512 = vxpose.xlu0.b32.end [16/16] 0.0, 128
  %v513 = vpop.trf.xlu0
  %v514 = vpop.trf.xlu0
  %v515 = vpop.trf.xlu0
  %v516 = vpop.trf.xlu0
  %v517 = vpop.trf.xlu0
  %v518 = vpop.trf.xlu0
  %v519 = vpop.trf.xlu0
  %v520 = vpop.trf.xlu0
  %v521 = vpop.trf.xlu0
  %v522 = vpop.trf.xlu0
  %v523 = vpop.trf.xlu0
  %v524 = vpop.trf.xlu0
  %v525 = vpop.trf.xlu0
  %v526 = vpop.trf.xlu0
  %v527 = vpop.trf.xlu0
  %v528 = vpop.trf.xlu0
  %vm529 = vcmask 97280
  %530 = vst.msk [vmem:[%s2] sm:$0xff] %vm529, %v513
  %531 = vst.msk [vmem:[%s2 + $0x8] sm:$0xff] %vm529, %v514
  %v532 = vld [vmem:[#allocation3 + $0xc] sm:$0xff]
  %v533 = vld [vmem:[#allocation3 + $0x14] sm:$0xf]
  %534 = vxpose.xlu0.b32.start [1/16] %v532, 128
  %535 = vxpose.xlu0.b32.cont [2/16] %v533, 128
  %536 = vxpose.xlu0.b32.cont [3/16] 0.0, 128
  %537 = vxpose.xlu0.b32.cont [4/16] 0.0, 128
  %538 = vxpose.xlu0.b32.cont [5/16] 0.0, 128
  %539 = vxpose.xlu0.b32.cont [6/16] 0.0, 128
  %540 = vxpose.xlu0.b32.cont [7/16] 0.0, 128
  %541 = vxpose.xlu0.b32.cont [8/16] 0.0, 128
  %542 = vxpose.xlu0.b32.cont [9/16] 0.0, 128
  %543 = vxpose.xlu0.b32.cont [10/16] 0.0, 128
  %544 = vxpose.xlu0.b32.cont [11/16] 0.0, 128
  %545 = vxpose.xlu0.b32.cont [12/16] 0.0, 128
  %546 = vxpose.xlu0.b32.cont [13/16] 0.0, 128
  %547 = vxpose.xlu0.b32.cont [14/16] 0.0, 128
  %548 = vxpose.xlu0.b32.cont [15/16] 0.0, 128
  %549 = vxpose.xlu0.b32.end [16/16] 0.0, 128
  %v550 = vpop.trf.xlu0
  %v551 = vpop.trf.xlu0
  %v552 = vpop.trf.xlu0
  %v553 = vpop.trf.xlu0
  %v554 = vpop.trf.xlu0
  %v555 = vpop.trf.xlu0
  %v556 = vpop.trf.xlu0
  %v557 = vpop.trf.xlu0
  %v558 = vpop.trf.xlu0
  %v559 = vpop.trf.xlu0
  %v560 = vpop.trf.xlu0
  %v561 = vpop.trf.xlu0
  %v562 = vpop.trf.xlu0
  %v563 = vpop.trf.xlu0
  %v564 = vpop.trf.xlu0
  %v565 = vpop.trf.xlu0
  %s566 = scalar_lea.vmem %s2, 16
  %567 = vst.msk [vmem:[%s566] sm:$0xff] %vm529, %v550
  %568 = vst.msk [vmem:[%s566 + $0x8] sm:$0xff] %vm529, %v551
  %v569 = vld [vmem:[#allocation3 + $0x18] sm:$0xff]
  %v570 = vld [vmem:[#allocation3 + $0x20] sm:$0xf]
  %571 = vxpose.xlu0.b32.start [1/16] %v569, 128
  %572 = vxpose.xlu0.b32.cont [2/16] %v570, 128
  %573 = vxpose.xlu0.b32.cont [3/16] 0.0, 128
  %574 = vxpose.xlu0.b32.cont [4/16] 0.0, 128
  %575 = vxpose.xlu0.b32.cont [5/16] 0.0, 128
  %576 = vxpose.xlu0.b32.cont [6/16] 0.0, 128
  %577 = vxpose.xlu0.b32.cont [7/16] 0.0, 128
  %578 = vxpose.xlu0.b32.cont [8/16] 0.0, 128
  %579 = vxpose.xlu0.b32.cont [9/16] 0.0, 128
  %580 = vxpose.xlu0.b32.cont [10/16] 0.0, 128
  %581 = vxpose.xlu0.b32.cont [11/16] 0.0, 128
  %582 = vxpose.xlu0.b32.cont [12/16] 0.0, 128
  %583 = vxpose.xlu0.b32.cont [13/16] 0.0, 128
  %584 = vxpose.xlu0.b32.cont [14/16] 0.0, 128
  %585 = vxpose.xlu0.b32.cont [15/16] 0.0, 128
  %586 = vxpose.xlu0.b32.end [16/16] 0.0, 128
  %v587 = vpop.trf.xlu0
  %v588 = vpop.trf.xlu0
  %v589 = vpop.trf.xlu0
  %v590 = vpop.trf.xlu0
  %v591 = vpop.trf.xlu0
  %v592 = vpop.trf.xlu0
  %v593 = vpop.trf.xlu0
  %v594 = vpop.trf.xlu0
  %v595 = vpop.trf.xlu0
  %v596 = vpop.trf.xlu0
  %v597 = vpop.trf.xlu0
  %v598 = vpop.trf.xlu0
  %v599 = vpop.trf.xlu0
  %v600 = vpop.trf.xlu0
  %v601 = vpop.trf.xlu0
  %v602 = vpop.trf.xlu0
  %s603 = scalar_lea.vmem %s2, 32
  %604 = vst.msk [vmem:[%s603] sm:$0xff] %vm529, %v587
  %605 = vst.msk [vmem:[%s603 + $0x8] sm:$0xff] %vm529, %v588
  %v606 = vld [vmem:[#allocation3 + $0x24] sm:$0xff]
  %v607 = vld [vmem:[#allocation3 + $0x2c] sm:$0xf]
  %608 = vxpose.xlu0.b32.start [1/16] %v606, 128
  %609 = vxpose.xlu0.b32.cont [2/16] %v607, 128
  %610 = vxpose.xlu0.b32.cont [3/16] 0.0, 128
  %611 = vxpose.xlu0.b32.cont [4/16] 0.0, 128
  %612 = vxpose.xlu0.b32.cont [5/16] 0.0, 128
  %613 = vxpose.xlu0.b32.cont [6/16] 0.0, 128
  %614 = vxpose.xlu0.b32.cont [7/16] 0.0, 128
  %615 = vxpose.xlu0.b32.cont [8/16] 0.0, 128
  %616 = vxpose.xlu0.b32.cont [9/16] 0.0, 128
  %617 = vxpose.xlu0.b32.cont [10/16] 0.0, 128
  %618 = vxpose.xlu0.b32.cont [11/16] 0.0, 128
  %619 = vxpose.xlu0.b32.cont [12/16] 0.0, 128
  %620 = vxpose.xlu0.b32.cont [13/16] 0.0, 128
  %621 = vxpose.xlu0.b32.cont [14/16] 0.0, 128
  %622 = vxpose.xlu0.b32.cont [15/16] 0.0, 128
  %623 = vxpose.xlu0.b32.end [16/16] 0.0, 128
  %v624 = vpop.trf.xlu0
  %v625 = vpop.trf.xlu0
  %v626 = vpop.trf.xlu0
  %v627 = vpop.trf.xlu0
  %v628 = vpop.trf.xlu0
  %v629 = vpop.trf.xlu0
  %v630 = vpop.trf.xlu0
  %v631 = vpop.trf.xlu0
  %v632 = vpop.trf.xlu0
  %v633 = vpop.trf.xlu0
  %v634 = vpop.trf.xlu0
  %v635 = vpop.trf.xlu0
  %v636 = vpop.trf.xlu0
  %v637 = vpop.trf.xlu0
  %v638 = vpop.trf.xlu0
  %v639 = vpop.trf.xlu0
  %s640 = scalar_lea.vmem %s2, 48
  %641 = vst.msk [vmem:[%s640] sm:$0xff] %vm529, %v624
  %642 = vst.msk [vmem:[%s640 + $0x8] sm:$0xff] %vm529, %v625
  %v643 = vld [vmem:[#allocation3 + $0x30] sm:$0xff]
  %v644 = vld [vmem:[#allocation3 + $0x38] sm:$0xf]
  %645 = vxpose.xlu0.b32.start [1/16] %v643, 128
  %646 = vxpose.xlu0.b32.cont [2/16] %v644, 128
  %647 = vxpose.xlu0.b32.cont [3/16] 0.0, 128
  %648 = vxpose.xlu0.b32.cont [4/16] 0.0, 128
  %649 = vxpose.xlu0.b32.cont [5/16] 0.0, 128
  %650 = vxpose.xlu0.b32.cont [6/16] 0.0, 128
  %651 = vxpose.xlu0.b32.cont [7/16] 0.0, 128
  %652 = vxpose.xlu0.b32.cont [8/16] 0.0, 128
  %653 = vxpose.xlu0.b32.cont [9/16] 0.0, 128
  %654 = vxpose.xlu0.b32.cont [10/16] 0.0, 128
  %655 = vxpose.xlu0.b32.cont [11/16] 0.0, 128
  %656 = vxpose.xlu0.b32.cont [12/16] 0.0, 128
  %657 = vxpose.xlu0.b32.cont [13/16] 0.0, 128
  %658 = vxpose.xlu0.b32.cont [14/16] 0.0, 128
  %659 = vxpose.xlu0.b32.cont [15/16] 0.0, 128
  %660 = vxpose.xlu0.b32.end [16/16] 0.0, 128
  %v661 = vpop.trf.xlu0
  %v662 = vpop.trf.xlu0
  %v663 = vpop.trf.xlu0
  %v664 = vpop.trf.xlu0
  %v665 = vpop.trf.xlu0
  %v666 = vpop.trf.xlu0
  %v667 = vpop.trf.xlu0
  %v668 = vpop.trf.xlu0
  %v669 = vpop.trf.xlu0
  %v670 = vpop.trf.xlu0
  %v671 = vpop.trf.xlu0
  %v672 = vpop.trf.xlu0
  %v673 = vpop.trf.xlu0
  %v674 = vpop.trf.xlu0
  %v675 = vpop.trf.xlu0
  %v676 = vpop.trf.xlu0
  %s677 = scalar_lea.vmem %s2, 64
  %678 = vst.msk [vmem:[%s677] sm:$0xff] %vm529, %v661
  %679 = vst.msk [vmem:[%s677 + $0x8] sm:$0xff] %vm529, %v662
  %v680 = vld [vmem:[#allocation3 + $0x3c] sm:$0xff]
  %v681 = vld [vmem:[#allocation3 + $0x44] sm:$0xf]
  %682 = vxpose.xlu0.b32.start [1/16] %v680, 128
  %683 = vxpose.xlu0.b32.cont [2/16] %v681, 128
  %684 = vxpose.xlu0.b32.cont [3/16] 0.0, 128
  %685 = vxpose.xlu0.b32.cont [4/16] 0.0, 128
  %686 = vxpose.xlu0.b32.cont [5/16] 0.0, 128
  %687 = vxpose.xlu0.b32.cont [6/16] 0.0, 128
  %688 = vxpose.xlu0.b32.cont [7/16] 0.0, 128
  %689 = vxpose.xlu0.b32.cont [8/16] 0.0, 128
  %690 = vxpose.xlu0.b32.cont [9/16] 0.0, 128
  %691 = vxpose.xlu0.b32.cont [10/16] 0.0, 128
  %692 = vxpose.xlu0.b32.cont [11/16] 0.0, 128
  %693 = vxpose.xlu0.b32.cont [12/16] 0.0, 128
  %694 = vxpose.xlu0.b32.cont [13/16] 0.0, 128
  %695 = vxpose.xlu0.b32.cont [14/16] 0.0, 128
  %696 = vxpose.xlu0.b32.cont [15/16] 0.0, 128
  %697 = vxpose.xlu0.b32.end [16/16] 0.0, 128
  %v698 = vpop.trf.xlu0
  %v699 = vpop.trf.xlu0
  %v700 = vpop.trf.xlu0
  %v701 = vpop.trf.xlu0
  %v702 = vpop.trf.xlu0
  %v703 = vpop.trf.xlu0
  %v704 = vpop.trf.xlu0
  %v705 = vpop.trf.xlu0
  %v706 = vpop.trf.xlu0
  %v707 = vpop.trf.xlu0
  %v708 = vpop.trf.xlu0
  %v709 = vpop.trf.xlu0
  %v710 = vpop.trf.xlu0
  %v711 = vpop.trf.xlu0
  %v712 = vpop.trf.xlu0
  %v713 = vpop.trf.xlu0
  %s714 = scalar_lea.vmem %s2, 80
  %715 = vst.msk [vmem:[%s714] sm:$0xff] %vm529, %v698
  %716 = vst.msk [vmem:[%s714 + $0x8] sm:$0xff] %vm529, %v699
  %v717 = vld [vmem:[#allocation3 + $0x48] sm:$0xff]
  %v718 = vld [vmem:[#allocation3 + $0x50] sm:$0xf]
  %719 = vxpose.xlu0.b32.start [1/16] %v717, 128
  %720 = vxpose.xlu0.b32.cont [2/16] %v718, 128
  %721 = vxpose.xlu0.b32.cont [3/16] 0.0, 128
  %722 = vxpose.xlu0.b32.cont [4/16] 0.0, 128
  %723 = vxpose.xlu0.b32.cont [5/16] 0.0, 128
  %724 = vxpose.xlu0.b32.cont [6/16] 0.0, 128
  %725 = vxpose.xlu0.b32.cont [7/16] 0.0, 128
  %726 = vxpose.xlu0.b32.cont [8/16] 0.0, 128
  %727 = vxpose.xlu0.b32.cont [9/16] 0.0, 128
  %728 = vxpose.xlu0.b32.cont [10/16] 0.0, 128
  %729 = vxpose.xlu0.b32.cont [11/16] 0.0, 128
  %730 = vxpose.xlu0.b32.cont [12/16] 0.0, 128
  %731 = vxpose.xlu0.b32.cont [13/16] 0.0, 128
  %732 = vxpose.xlu0.b32.cont [14/16] 0.0, 128
  %733 = vxpose.xlu0.b32.cont [15/16] 0.0, 128
  %734 = vxpose.xlu0.b32.end [16/16] 0.0, 128
  %v735 = vpop.trf.xlu0
  %v736 = vpop.trf.xlu0
  %v737 = vpop.trf.xlu0
  %v738 = vpop.trf.xlu0
  %v739 = vpop.trf.xlu0
  %v740 = vpop.trf.xlu0
  %v741 = vpop.trf.xlu0
  %v742 = vpop.trf.xlu0
  %v743 = vpop.trf.xlu0
  %v744 = vpop.trf.xlu0
  %v745 = vpop.trf.xlu0
  %v746 = vpop.trf.xlu0
  %v747 = vpop.trf.xlu0
  %v748 = vpop.trf.xlu0
  %v749 = vpop.trf.xlu0
  %v750 = vpop.trf.xlu0
  %s751 = scalar_lea.vmem %s2, 96
  %752 = vst.msk [vmem:[%s751] sm:$0xff] %vm529, %v735
  %753 = vst.msk [vmem:[%s751 + $0x8] sm:$0xff] %vm529, %v736
  %v754 = vld [vmem:[#allocation3 + $0x54] sm:$0xff]
  %v755 = vld [vmem:[#allocation3 + $0x5c] sm:$0xf]
  %756 = vxpose.xlu0.b32.start [1/16] %v754, 128
  %757 = vxpose.xlu0.b32.cont [2/16] %v755, 128
  %758 = vxpose.xlu0.b32.cont [3/16] 0.0, 128
  %759 = vxpose.xlu0.b32.cont [4/16] 0.0, 128
  %760 = vxpose.xlu0.b32.cont [5/16] 0.0, 128
  %761 = vxpose.xlu0.b32.cont [6/16] 0.0, 128
  %762 = vxpose.xlu0.b32.cont [7/16] 0.0, 128
  %763 = vxpose.xlu0.b32.cont [8/16] 0.0, 128
  %764 = vxpose.xlu0.b32.cont [9/16] 0.0, 128
  %765 = vxpose.xlu0.b32.cont [10/16] 0.0, 128
  %766 = vxpose.xlu0.b32.cont [11/16] 0.0, 128
  %767 = vxpose.xlu0.b32.cont [12/16] 0.0, 128
  %768 = vxpose.xlu0.b32.cont [13/16] 0.0, 128
  %769 = vxpose.xlu0.b32.cont [14/16] 0.0, 128
  %770 = vxpose.xlu0.b32.cont [15/16] 0.0, 128
  %771 = vxpose.xlu0.b32.end [16/16] 0.0, 128
  %v772 = vpop.trf.xlu0
  %v773 = vpop.trf.xlu0
  %v774 = vpop.trf.xlu0
  %v775 = vpop.trf.xlu0
  %v776 = vpop.trf.xlu0
  %v777 = vpop.trf.xlu0
  %v778 = vpop.trf.xlu0
  %v779 = vpop.trf.xlu0
  %v780 = vpop.trf.xlu0
  %v781 = vpop.trf.xlu0
  %v782 = vpop.trf.xlu0
  %v783 = vpop.trf.xlu0
  %v784 = vpop.trf.xlu0
  %v785 = vpop.trf.xlu0
  %v786 = vpop.trf.xlu0
  %v787 = vpop.trf.xlu0
  %s788 = scalar_lea.vmem %s2, 112
  %789 = vst.msk [vmem:[%s788] sm:$0xff] %vm529, %v772
  %790 = vst.msk [vmem:[%s788 + $0x8] sm:$0xff] %vm529, %v773
  // Predicated region
  $region10: #{nconv.1} parent=0 // pred_check
    _
  $region11: #{nconv.1} parent=0 // pred_check_branch
    %792 = sbr.rel (0) target = $region13
  $region12: #{nconv.1} parent=0 // pred_region
    _
  $region13: #{nconv.1} parent=0 // pred_fallthru
    _
  // Predicated region
  $region14: #{nconv.1} parent=0 // pred_check
    _
  $region15: #{nconv.1} parent=0 // pred_check_branch
    %794 = sbr.rel (0) target = $region17
  $region16: #{nconv.1} parent=0 // pred_region
    _
  $region17: #{nconv.1} parent=0 // pred_fallthru
    _

</llo_original>
